<compile_context>
chip_gen: v7x
topology: tpu7x:2x2x1
jax: 0.10.0
libtpu: 0.0.40
codegen_flags: <defaults>
</compile_context>

<pallas_src>
import jax
import jax.numpy as jnp
from jax.experimental import pallas as pl
from jax.experimental.pallas import tpu as pltpu


def _round_up(x, m):
    return (x + m - 1) // m * m


def _gaussian_kernel(val_ref, const_ref, o_ref):
    # val_ref:   (R, 128) f32, lane-dense flattened values (R = tile_m // 128).
    # const_ref: (4, K) f32: row0 = mean, row1 = -0.5/std^2, row2 = 1/(a*std).
    # o_ref:     (R*128, K) in the final output dtype.
    R = val_ref.shape[0]

    mean = const_ref[pl.ds(0, 1), :]          # (1, K)
    nhiv = const_ref[pl.ds(1, 1), :]          # (1, K)  = -0.5 / std^2
    coef = const_ref[pl.ds(2, 1), :]          # (1, K)  = 1 / (a*std)

    # 128x128 identity mask (built once per grid step, outside the loop) used to
    # turn a lane-dense (1,128) row into a (128,1) column via mask + lane-reduce.
    rows = jax.lax.broadcasted_iota(jnp.int32, (128, 128), 0)
    cols = jax.lax.broadcasted_iota(jnp.int32, (128, 128), 1)
    eye = jnp.where(rows == cols, 1.0, 0.0).astype(jnp.float32)

    def chunk(r, carry):
        vrow = val_ref[pl.ds(r, 1), :]                        # (1, 128)
        vb = jnp.broadcast_to(vrow, (128, 128))               # sublane broadcast
        vcol = jnp.sum(vb * eye, axis=1, keepdims=True)       # (128, 1) "transpose"
        d = vcol - mean                                        # (128, K)
        g = jnp.exp((d * d) * nhiv) * coef                     # single EUP op / elem
        row0 = pl.multiple_of(r * 128, 128)
        o_ref[pl.ds(row0, 128), :] = g.astype(o_ref.dtype)
        return carry

    jax.lax.fori_loop(0, R, chunk, 0, unroll=False)


def gaussian_layer_pallas(x, edge_type, means_w, stds_w, mul_w, bias_w, *, tile_m=8192):
    """x: [B, N, N] float, edge_type: [B, N, N] int32.

    means_w, stds_w: [1, K]; mul_w, bias_w: [edge_types, 1].
    Returns [B, N, N, K] with the dtype of means_w (as in the PyTorch module).
    """
    B, N1, N2 = x.shape
    K = means_w.shape[1]
    out_dtype = means_w.dtype

    # --- glue: embedding lookups + affine (fuses with the gather in XLA) ---
    mul = mul_w[edge_type, 0].astype(x.dtype)                  # [B, N, N]
    bias = bias_w[edge_type, 0].astype(x.dtype)                # [B, N, N]
    val = (mul * x + bias).astype(jnp.float32)                 # [B, N, N]

    M = B * N1 * N2

    # --- tile sizing: multiples of 1024 when tiling, multiples of 128 always ---
    tile_m = _round_up(max(int(tile_m), 1024), 1024)
    tile_m = min(tile_m, _round_up(M, 128))                    # grid>1 => tile_m % 1024 == 0
    grid_m = pl.cdiv(M, tile_m)
    m_padded = grid_m * tile_m

    # Lane-dense val: pad the tail (never written back) and fold to 128 lanes.
    val_flat = jnp.pad(val.reshape(M), (0, m_padded - M))
    val2d = val_flat.reshape(m_padded // 128, 128)
    rows_per_block = tile_m // 128

    # --- hoisted per-K constants (computed once on K elements) ---
    pi = 3.14159                                               # matches torch.jit constant
    a = (2.0 * pi) ** 0.5
    mean = means_w.astype(jnp.float32).reshape(1, K)
    std = jnp.abs(stds_w.astype(jnp.float32).reshape(1, K)) + 1e-05
    nhiv = -0.5 / (std * std)                                  # -0.5 / std^2
    coef = 1.0 / (a * std)
    const = jnp.concatenate([mean, nhiv, coef, jnp.zeros_like(mean)], axis=0)  # (4, K)

    out_itemsize = jnp.dtype(out_dtype).itemsize
    cost = pl.CostEstimate(
        flops=5 * M * K,
        transcendentals=M * K,
        bytes_accessed=M * K * out_itemsize + M * 4 + 4 * K * 4,
    )

    out = pl.pallas_call(
        _gaussian_kernel,
        out_shape=jax.ShapeDtypeStruct((M, K), out_dtype),
        grid_spec=pltpu.PrefetchScalarGridSpec(
            num_scalar_prefetch=0,
            grid=(grid_m,),
            in_specs=[
                pl.BlockSpec((rows_per_block, 128), lambda i: (i, 0)),
                pl.BlockSpec((4, K), lambda i: (0, 0)),
            ],
            out_specs=pl.BlockSpec((tile_m, K), lambda i: (i, 0)),
        ),
        compiler_params=pltpu.CompilerParams(
            dimension_semantics=("parallel",),
        ),
        cost_estimate=cost,
    )(val2d, const)

    return out.reshape(B, N1, N2, K)


def gaussian_layer_ref(x, edge_type, means_w, stds_w, mul_w, bias_w):
    """Pure-JAX reference mirroring the PyTorch forward exactly."""
    K = means_w.shape[1]
    mul = mul_w[edge_type].astype(x.dtype)
    bias = bias_w[edge_type].astype(x.dtype)
    xx = mul * x[..., None] + bias                             # [B, N, N, 1]
    xx = jnp.broadcast_to(xx, xx.shape[:-1] + (K,))            # expand(-1,-1,-1,K)
    mean = means_w.astype(jnp.float32).reshape(-1)
    std = jnp.abs(stds_w.astype(jnp.float32).reshape(-1)) + 1e-05
    pi = 3.14159
    a = (2.0 * pi) ** 0.5
    out = jnp.exp(-0.5 * ((xx.astype(jnp.float32) - mean) / std) ** 2) / (a * std)
    return out.astype(means_w.dtype)


if __name__ == "__main__":
    key = jax.random.PRNGKey(0)
    k_means, k_stds, k_x, k_et = jax.random.split(key, 4)

    # Module hyperparams (small but faithful: K=128 is the module default).
    K = 128
    edge_types = 32
    B, N = 2, 16                                               # M = 512 -> 4 in-kernel chunks

    # Deterministic parameter init mirroring nn.init in __init__:
    means_w = jax.random.uniform(k_means, (1, K), minval=0.0, maxval=3.0, dtype=jnp.float32)
    stds_w = jax.random.uniform(k_stds, (1, K), minval=0.0, maxval=3.0, dtype=jnp.float32)
    mul_w = jnp.ones((edge_types, 1), jnp.float32)             # nn.init.constant_(mul, 1)
    bias_w = jnp.zeros((edge_types, 1), jnp.float32)           # nn.init.constant_(bias, 0)

    # Inputs: pairwise distances x [B, N, N], edge types [B, N, N] int32.
    x = jax.random.uniform(k_x, (B, N, N), minval=0.0, maxval=5.0, dtype=jnp.float32)
    edge_type = jax.random.randint(k_et, (B, N, N), 0, edge_types, dtype=jnp.int32)

    out = gaussian_layer_pallas(x, edge_type, means_w, stds_w, mul_w, bias_w)
    out = jax.block_until_ready(out)

    ref = gaussian_layer_ref(x, edge_type, means_w, stds_w, mul_w, bias_w)
    assert out.shape == (B, N, N, K), out.shape
    assert out.dtype == means_w.dtype
    assert jnp.allclose(out, ref, atol=1e-5, rtol=1e-5), "mismatch vs reference"

    print("KERNEL_OK")
</pallas_src>

<mosaic_0001>
module attributes {stable_mosaic.version = 11 : i64} {
  func.func @_gaussian_kernel(%arg0: i32, %arg1: memref<4x128xf32, #tpu.memory_space<vmem>>, %arg2: memref<4x128xf32, #tpu.memory_space<vmem>>, %arg3: memref<512x128xf32, #tpu.memory_space<vmem>>) attributes {dimension_semantics = [#tpu.dimension_semantics<parallel>], iteration_bounds = array<i64: 1>, scalar_prefetch = 0 : i64, scratch_operands = 0 : i64, tpu.core_type = #tpu.core_type<tc>, window_params = [{transform_indices = @transform_0, window_bounds = array<i64: 4, 128>}, {pipeline_mode = #tpu.pipeline_mode<synchronous>, transform_indices = @transform_1, window_bounds = array<i64: 4, 128>}, {transform_indices = @transform_2, window_bounds = array<i64: 512, 128>}]} {
    %c0 = arith.constant 0 : index
    %c0_0 = arith.constant 0 : index
    %0 = vector.load %arg2[%c0, %c0_0] : memref<4x128xf32, #tpu.memory_space<vmem>>, vector<1x128xf32>
    %c1 = arith.constant 1 : index
    %c0_1 = arith.constant 0 : index
    %1 = vector.load %arg2[%c1, %c0_1] : memref<4x128xf32, #tpu.memory_space<vmem>>, vector<1x128xf32>
    %c2 = arith.constant 2 : index
    %c0_2 = arith.constant 0 : index
    %2 = vector.load %arg2[%c2, %c0_2] : memref<4x128xf32, #tpu.memory_space<vmem>>, vector<1x128xf32>
    %3 = tpu.iota {dimensions = array<i32: 0>} : vector<128x128xi32>
    %4 = tpu.iota {dimensions = array<i32: 1>} : vector<128x128xi32>
    %5 = arith.cmpi eq, %3, %4 : vector<128x128xi32>
    %cst = arith.constant 1.000000e+00 : f32
    %cst_3 = arith.constant 0.000000e+00 : f32
    %6 = vector.broadcast %cst : f32 to vector<128x128xf32>
    %7 = vector.broadcast %cst_3 : f32 to vector<128x128xf32>
    %8 = arith.select %5, %6, %7 : vector<128x128xi1>, vector<128x128xf32>
    %c0_i32 = arith.constant 0 : i32
    %c4_i32 = arith.constant 4 : i32
    %9 = arith.addi %c0_i32, %c4_i32 : i32
    %c1_i32 = arith.constant 1 : i32
    scf.for %arg4 = %c0_i32 to %9 step %c1_i32  : i32 {
      %10 = arith.index_cast %arg4 : i32 to index
      %c0_5 = arith.constant 0 : index
      %11 = vector.load %arg1[%10, %c0_5] : memref<4x128xf32, #tpu.memory_space<vmem>>, vector<1x128xf32>
      %12 = vector.shape_cast %11 : vector<1x128xf32> to vector<1x128xf32>
      %13 = vector.broadcast %12 : vector<1x128xf32> to vector<128x128xf32>
      %14 = arith.mulf %13, %8 : vector<128x128xf32>
      %cst_6 = arith.constant dense<0.000000e+00> : vector<128xf32>
      %15 = vector.multi_reduction <add>, %14, %cst_6 [1] : vector<128x128xf32> to vector<128xf32>
      %16 = vector.shape_cast %15 : vector<128xf32> to vector<128x1xf32>
      %17 = vector.broadcast %16 : vector<128x1xf32> to vector<128x128xf32>
      %18 = vector.broadcast %0 : vector<1x128xf32> to vector<128x128xf32>
      %19 = arith.subf %17, %18 : vector<128x128xf32>
      %20 = arith.mulf %19, %19 : vector<128x128xf32>
      %21 = vector.broadcast %1 : vector<1x128xf32> to vector<128x128xf32>
      %22 = arith.mulf %20, %21 : vector<128x128xf32>
      %23 = math.exp %22 : vector<128x128xf32>
      %24 = vector.broadcast %2 : vector<1x128xf32> to vector<128x128xf32>
      %25 = arith.mulf %23, %24 : vector<128x128xf32>
      %c128_i32 = arith.constant 128 : i32
      %26 = arith.muli %arg4, %c128_i32 : i32
      %27 = tpu.assume_multiple %26, 128 : i32
      %28 = arith.index_cast %27 : i32 to index
      %c0_7 = arith.constant 0 : index
      %29 = vector.load %arg3[%28, %c0_7] : memref<512x128xf32, #tpu.memory_space<vmem>>, vector<128x128xf32>
      tpu.vector_store %arg3[%28, %c0_7], %25 {strides = array<i32>} : memref<512x128xf32, #tpu.memory_space<vmem>>, vector<128x128xf32>,
    }
    %c4_i32_4 = arith.constant 4 : i32
    return
  }
  func.func @transform_0(%arg0: i32) -> (i32, i32) {
    %c0_i32 = arith.constant 0 : i32
    %c0_i32_0 = arith.constant 0 : i32
    return %arg0, %c0_i32 : i32, i32
  }
  func.func @transform_1(%arg0: i32) -> (i32, i32) {
    %c0_i32 = arith.constant 0 : i32
    %c0_i32_0 = arith.constant 0 : i32
    %c0_i32_1 = arith.constant 0 : i32
    return %c0_i32, %c0_i32_0 : i32, i32
  }
  func.func @transform_2(%arg0: i32) -> (i32, i32) {
    %c0_i32 = arith.constant 0 : i32
    %c0_i32_0 = arith.constant 0 : i32
    return %arg0, %c0_i32 : i32, i32
  }
}

</mosaic_0001>

<llo_original>
// kernel: tpu_custom_call.1
$region0: #{tpu_custom_call.1}
  #allocation0 [shape = 'u32[]', space=smem, size = 0x4, offset = 0x4, fixed_abs, tag = 'smem constant byte address 0x4 - core index']
  #allocation1 [shape = 'u32[144,128]{1,0:T(1,128)}', space=vmem, size = 0x12000, scoped, tag = 'internal scratch']
  %s0 = inlined_call_operand.hbm [shape: f32[4,128], index: 0, kind: input, shape index: {}]
  %s1 = inlined_call_operand.hbm [shape: f32[4,128], index: 1, kind: input, shape index: {}]
  %s2 = inlined_call_operand.hbm [shape: f32[512,128], index: 2, kind: output, shape index: {}]
  %s3 = sld [smem:[#allocation0]]
  $region33: #{tpu_custom_call.1} parent=0
    _
  %s5 = ssub.s32 1, %s3
  %s6 = scalar_select 0, %s5, %s3
  $region1: #{tpu_custom_call.1} parent=0
    #allocation2 [shape = 'u8[2048]{0}', space=vmem, size = 0x800, scoped, tag = 'input window, operand 0, single buffered']
    #allocation3 [shape = 's32[1]{0}', space=sflag, size = 0x4, scoped, tag = 'scoped memory for tpu_custom_call.1']
    #allocation4 [shape = 's32[1]{0}', space=sflag, size = 0x4, scoped, tag = 'scoped memory for tpu_custom_call.1']
    #allocation5 [shape = 'u8[2048]{0}', space=vmem, size = 0x800, scoped, tag = 'input window, operand 1, single buffered']
    #allocation6 [shape = 's32[1]{0}', space=sflag, size = 0x4, scoped, tag = 'scoped memory for tpu_custom_call.1']
    #allocation7 [shape = 'u8[262144]{0}', space=vmem, size = 0x40000, scoped, tag = 'output window, operand 0, single buffered']
    %7 = vsyncpa [#allocation3], 0
    %8 = vsyncpa [#allocation6], 0
    %9 = vsyncpa [#allocation4], 0
    // Predicated region
    $region2: #{tpu_custom_call.1} parent=1 // pred_check
      _
    $region3: #{tpu_custom_call.1} parent=1 // pred_check_branch
      %11 = sbr.rel (0) target = $region5
    $region4: #{tpu_custom_call.1} parent=1 // pred_region
      %s13 = ssub.s32 64, 64
      %14 = vsyncadd [#allocation3], %s13
      %s16 = sshll.u32 [#allocation2], 4
      %s17 = int_to_ptr.vmem [resolvable:$true] %s16
      %19 = dma.hbm_to_vmem [thread:$0]  %s0, 64, %s17, [#allocation3]
    $region5: #{tpu_custom_call.1} parent=1 // pred_fallthru
      _
    // Predicated region
    $region6: #{tpu_custom_call.1} parent=1 // pred_check
      _
    $region7: #{tpu_custom_call.1} parent=1 // pred_check_branch
      %21 = sbr.rel (0) target = $region9
    $region8: #{tpu_custom_call.1} parent=1 // pred_region
      %s23 = ssub.s32 64, 64
      %24 = vsyncadd [#allocation6], %s23
      %s26 = sshll.u32 [#allocation5], 4
      %s27 = int_to_ptr.vmem [resolvable:$true] %s26
      %29 = dma.hbm_to_vmem [thread:$0]  %s1, 64, %s27, [#allocation6]
    $region9: #{tpu_custom_call.1} parent=1 // pred_fallthru
      _
    // Predicated region
    $region10: #{tpu_custom_call.1} parent=1 // pred_check
      _
    $region11: #{tpu_custom_call.1} parent=1 // pred_check_branch
      %31 = sbr.rel (0) target = $region13
    $region12: #{tpu_custom_call.1} parent=1 // pred_region
      %32 = dma.done [#allocation3], 64
    $region13: #{tpu_custom_call.1} parent=1 // pred_fallthru
      _
    // Predicated region
    $region14: #{tpu_custom_call.1} parent=1 // pred_check
      _
    $region15: #{tpu_custom_call.1} parent=1 // pred_check_branch
      %34 = sbr.rel (0) target = $region17
    $region16: #{tpu_custom_call.1} parent=1 // pred_region
      %35 = dma.done [#allocation6], 64
    $region17: #{tpu_custom_call.1} parent=1 // pred_fallthru
      _
    %v36 = vld [vmem:[#allocation5] sm:$0x1]
    %v37 = vld [vmem:[#allocation5 + $0x1] sm:$0x1]
    %v38 = vld [vmem:[#allocation5 + $0x2] sm:$0x1]
    %v39 = vlaneseq
    %v40 = vshrl.u32 %v39, 7
    %v41 = vadd.s32 %v40, 8
    %v42 = vadd.s32 %v40, 16
    %v43 = vadd.s32 %v40, 24
    %v44 = vadd.s32 %v40, 32
    %v45 = vadd.s32 %v40, 40
    %v46 = vadd.s32 %v40, 48
    %v47 = vadd.s32 %v40, 56
    %v48 = vadd.s32 %v40, 64
    %v49 = vadd.s32 %v40, 72
    %v50 = vadd.s32 %v40, 80
    %v51 = vadd.s32 %v40, 88
    %v52 = vadd.s32 %v40, 96
    %v53 = vadd.s32 %v40, 104
    %v54 = vadd.s32 %v40, 112
    %v55 = vadd.s32 %v40, 120
    %v56 = vlaneseq
    %v57 = vand.u32 %v56, 127
    %vm58 = vcmp.eq.s32.totalorder %v40, %v57
    %vm59 = vcmp.eq.s32.totalorder %v41, %v57
    %vm60 = vcmp.eq.s32.totalorder %v42, %v57
    %vm61 = vcmp.eq.s32.totalorder %v43, %v57
    %vm62 = vcmp.eq.s32.totalorder %v44, %v57
    %vm63 = vcmp.eq.s32.totalorder %v45, %v57
    %vm64 = vcmp.eq.s32.totalorder %v46, %v57
    %vm65 = vcmp.eq.s32.totalorder %v47, %v57
    %vm66 = vcmp.eq.s32.totalorder %v48, %v57
    %vm67 = vcmp.eq.s32.totalorder %v49, %v57
    %vm68 = vcmp.eq.s32.totalorder %v50, %v57
    %vm69 = vcmp.eq.s32.totalorder %v51, %v57
    %vm70 = vcmp.eq.s32.totalorder %v52, %v57
    %vm71 = vcmp.eq.s32.totalorder %v53, %v57
    %vm72 = vcmp.eq.s32.totalorder %v54, %v57
    %vm73 = vcmp.eq.s32.totalorder %v55, %v57
    %v74 = vsel %vm58, 1.0, 0.0
    %v75 = vsel %vm59, 1.0, 0.0
    %v76 = vsel %vm60, 1.0, 0.0
    %v77 = vsel %vm61, 1.0, 0.0
    %v78 = vsel %vm62, 1.0, 0.0
    %v79 = vsel %vm63, 1.0, 0.0
    %v80 = vsel %vm64, 1.0, 0.0
    %v81 = vsel %vm65, 1.0, 0.0
    %v82 = vsel %vm66, 1.0, 0.0
    %v83 = vsel %vm67, 1.0, 0.0
    %v84 = vsel %vm68, 1.0, 0.0
    %v85 = vsel %vm69, 1.0, 0.0
    %v86 = vsel %vm70, 1.0, 0.0
    %v87 = vsel %vm71, 1.0, 0.0
    %v88 = vsel %vm72, 1.0, 0.0
    %v89 = vsel %vm73, 1.0, 0.0
    loop: start=0, step=1, limit=4
    $region18: #{tpu_custom_call.1} parent=1 // loop_pre_header
      _
    $region19: #{tpu_custom_call.1} parent=1 // loop_header
      %s91 = sphi 0, %s95
      %p92 = scmp.ge.s32.totalorder %s91, 4
    $region20: #{tpu_custom_call.1} parent=1 // loop_header_branch
      %94 = sbr.rel (%p92) target = $region24
    $region21: #{tpu_custom_call.1} parent=1 // loop_body
      %s96 = scalar_lea.vmem [#allocation2], %s91
      %v97 = vld [vmem:[%s96] sm:$0x1]
      %v98 = vlaneseq
      %v99 = vshrl.u32 %v98, 7
      %v100 = vsub.s32 0, %v99
      %v101 = vrot.slane %v97, %v100
      %v102 = vmul.f32 %v101, %v74
      %v103 = vmul.f32 %v101, %v75
      %v104 = vmul.f32 %v101, %v76
      %v105 = vmul.f32 %v101, %v77
      %v106 = vmul.f32 %v101, %v78
      %v107 = vmul.f32 %v101, %v79
      %v108 = vmul.f32 %v101, %v80
      %v109 = vmul.f32 %v101, %v81
      %v110 = vmul.f32 %v101, %v82
      %v111 = vmul.f32 %v101, %v83
      %v112 = vmul.f32 %v101, %v84
      %v113 = vmul.f32 %v101, %v85
      %v114 = vmul.f32 %v101, %v86
      %v115 = vmul.f32 %v101, %v87
      %v116 = vmul.f32 %v101, %v88
      %v117 = vmul.f32 %v101, %v89
      %118 = vadd.xlane.f32.xlu0 %v102
      %v119 = vpop.xlane.xlu0 %118
      %120 = vadd.xlane.f32.xlu0 %v103
      %v121 = vpop.xlane.xlu0 %120
      %122 = vadd.xlane.f32.xlu0 %v104
      %v123 = vpop.xlane.xlu0 %122
      %124 = vadd.xlane.f32.xlu0 %v105
      %v125 = vpop.xlane.xlu0 %124
      %126 = vadd.xlane.f32.xlu0 %v106
      %v127 = vpop.xlane.xlu0 %126
      %128 = vadd.xlane.f32.xlu0 %v107
      %v129 = vpop.xlane.xlu0 %128
      %130 = vadd.xlane.f32.xlu0 %v108
      %v131 = vpop.xlane.xlu0 %130
      %132 = vadd.xlane.f32.xlu0 %v109
      %v133 = vpop.xlane.xlu0 %132
      %134 = vadd.xlane.f32.xlu0 %v110
      %v135 = vpop.xlane.xlu0 %134
      %136 = vadd.xlane.f32.xlu0 %v111
      %v137 = vpop.xlane.xlu0 %136
      %138 = vadd.xlane.f32.xlu0 %v112
      %v139 = vpop.xlane.xlu0 %138
      %140 = vadd.xlane.f32.xlu0 %v113
      %v141 = vpop.xlane.xlu0 %140
      %142 = vadd.xlane.f32.xlu0 %v114
      %v143 = vpop.xlane.xlu0 %142
      %144 = vadd.xlane.f32.xlu0 %v115
      %v145 = vpop.xlane.xlu0 %144
      %146 = vadd.xlane.f32.xlu0 %v116
      %v147 = vpop.xlane.xlu0 %146
      %148 = vadd.xlane.f32.xlu0 %v117
      %v149 = vpop.xlane.xlu0 %148
      %v150 = vlaneseq
      %v151 = vshrl.u32 %v150, 7
      %v152 = vsub.s32 0, %v151
      %v153 = vrot.slane %v36, %v152
      %v154 = vsub.f32 %v119, %v153
      %v155 = vsub.f32 %v121, %v153
      %v156 = vsub.f32 %v123, %v153
      %v157 = vsub.f32 %v125, %v153
      %v158 = vsub.f32 %v127, %v153
      %v159 = vsub.f32 %v129, %v153
      %v160 = vsub.f32 %v131, %v153
      %v161 = vsub.f32 %v133, %v153
      %v162 = vsub.f32 %v135, %v153
      %v163 = vsub.f32 %v137, %v153
      %v164 = vsub.f32 %v139, %v153
      %v165 = vsub.f32 %v141, %v153
      %v166 = vsub.f32 %v143, %v153
      %v167 = vsub.f32 %v145, %v153
      %v168 = vsub.f32 %v147, %v153
      %v169 = vsub.f32 %v149, %v153
      %v170 = vmul.f32 %v154, %v154
      %v171 = vmul.f32 %v155, %v155
      %v172 = vmul.f32 %v156, %v156
      %v173 = vmul.f32 %v157, %v157
      %v174 = vmul.f32 %v158, %v158
      %v175 = vmul.f32 %v159, %v159
      %v176 = vmul.f32 %v160, %v160
      %v177 = vmul.f32 %v161, %v161
      %v178 = vmul.f32 %v162, %v162
      %v179 = vmul.f32 %v163, %v163
      %v180 = vmul.f32 %v164, %v164
      %v181 = vmul.f32 %v165, %v165
      %v182 = vmul.f32 %v166, %v166
      %v183 = vmul.f32 %v167, %v167
      %v184 = vmul.f32 %v168, %v168
      %v185 = vmul.f32 %v169, %v169
      %v186 = vlaneseq
      %v187 = vshrl.u32 %v186, 7
      %v188 = vsub.s32 0, %v187
      %v189 = vrot.slane %v37, %v188
      %v190 = vmul.f32 %v170, %v189
      %v191 = vmul.f32 %v171, %v189
      %v192 = vmul.f32 %v172, %v189
      %v193 = vmul.f32 %v173, %v189
      %v194 = vmul.f32 %v174, %v189
      %v195 = vmul.f32 %v175, %v189
      %v196 = vmul.f32 %v176, %v189
      %v197 = vmul.f32 %v177, %v189
      %v198 = vmul.f32 %v178, %v189
      %v199 = vmul.f32 %v179, %v189
      %v200 = vmul.f32 %v180, %v189
      %v201 = vmul.f32 %v181, %v189
      %v202 = vmul.f32 %v182, %v189
      %v203 = vmul.f32 %v183, %v189
      %v204 = vmul.f32 %v184, %v189
      %v205 = vmul.f32 %v185, %v189
      %v206 = vmul.f32 %v190, 1.442695
      %v207 = vpow.pop %v206
      %v208 = vmul.f32 %v191, 1.442695
      %v209 = vpow.pop %v208
      %v210 = vmul.f32 %v192, 1.442695
      %v211 = vpow.pop %v210
      %v212 = vmul.f32 %v193, 1.442695
      %v213 = vpow.pop %v212
      %v214 = vmul.f32 %v194, 1.442695
      %v215 = vpow.pop %v214
      %v216 = vmul.f32 %v195, 1.442695
      %v217 = vpow.pop %v216
      %v218 = vmul.f32 %v196, 1.442695
      %v219 = vpow.pop %v218
      %v220 = vmul.f32 %v197, 1.442695
      %v221 = vpow.pop %v220
      %v222 = vmul.f32 %v198, 1.442695
      %v223 = vpow.pop %v222
      %v224 = vmul.f32 %v199, 1.442695
      %v225 = vpow.pop %v224
      %v226 = vmul.f32 %v200, 1.442695
      %v227 = vpow.pop %v226
      %v228 = vmul.f32 %v201, 1.442695
      %v229 = vpow.pop %v228
      %v230 = vmul.f32 %v202, 1.442695
      %v231 = vpow.pop %v230
      %v232 = vmul.f32 %v203, 1.442695
      %v233 = vpow.pop %v232
      %v234 = vmul.f32 %v204, 1.442695
      %v235 = vpow.pop %v234
      %v236 = vmul.f32 %v205, 1.442695
      %v237 = vpow.pop %v236
      %v238 = vlaneseq
      %v239 = vshrl.u32 %v238, 7
      %v240 = vsub.s32 0, %v239
      %v241 = vrot.slane %v38, %v240
      %v242 = vmul.f32 %v207, %v241
      %v243 = vmul.f32 %v209, %v241
      %v244 = vmul.f32 %v211, %v241
      %v245 = vmul.f32 %v213, %v241
      %v246 = vmul.f32 %v215, %v241
      %v247 = vmul.f32 %v217, %v241
      %v248 = vmul.f32 %v219, %v241
      %v249 = vmul.f32 %v221, %v241
      %v250 = vmul.f32 %v223, %v241
      %v251 = vmul.f32 %v225, %v241
      %v252 = vmul.f32 %v227, %v241
      %v253 = vmul.f32 %v229, %v241
      %v254 = vmul.f32 %v231, %v241
      %v255 = vmul.f32 %v233, %v241
      %v256 = vmul.f32 %v235, %v241
      %v257 = vmul.f32 %v237, %v241
      %s258 = smul.u32 %s91, 128
      %s259 = scalar_lea.vmem [#allocation7], %s258
      %260 = vst [vmem:[%s259] sm:$0xff] %v242
      %261 = vst [vmem:[%s259 + $0x8] sm:$0xff] %v243
      %262 = vst [vmem:[%s259 + $0x10] sm:$0xff] %v244
      %263 = vst [vmem:[%s259 + $0x18] sm:$0xff] %v245
      %264 = vst [vmem:[%s259 + $0x20] sm:$0xff] %v246
      %265 = vst [vmem:[%s259 + $0x28] sm:$0xff] %v247
      %266 = vst [vmem:[%s259 + $0x30] sm:$0xff] %v248
      %267 = vst [vmem:[%s259 + $0x38] sm:$0xff] %v249
      %268 = vst [vmem:[%s259 + $0x40] sm:$0xff] %v250
      %269 = vst [vmem:[%s259 + $0x48] sm:$0xff] %v251
      %270 = vst [vmem:[%s259 + $0x50] sm:$0xff] %v252
      %271 = vst [vmem:[%s259 + $0x58] sm:$0xff] %v253
      %272 = vst [vmem:[%s259 + $0x60] sm:$0xff] %v254
      %273 = vst [vmem:[%s259 + $0x68] sm:$0xff] %v255
      %274 = vst [vmem:[%s259 + $0x70] sm:$0xff] %v256
      %275 = vst [vmem:[%s259 + $0x78] sm:$0xff] %v257
    $region22: #{tpu_custom_call.1} parent=1 // loop_footer
      %s95 = sadd.s32 1, %s91
    $region23: #{tpu_custom_call.1} parent=1 // loop_footer_branch
      %90 = sbr.rel target = $region19
    $region24: #{tpu_custom_call.1} parent=1 // loop_exit
      _
    // Predicated region
    $region25: #{tpu_custom_call.1} parent=1 // pred_check
      _
    $region26: #{tpu_custom_call.1} parent=1 // pred_check_branch
      %277 = sbr.rel (0) target = $region28
    $region27: #{tpu_custom_call.1} parent=1 // pred_region
      %s279 = ssub.s32 8192, 8192
      %280 = vsyncadd [#allocation4], %s279
      %s281 = sshll.u32 [#allocation7], 4
      %s282 = int_to_ptr.vmem [resolvable:$true] %s281
      %287 = dma.vmem_to_hbm [thread:$0]  %s282, 8192, %s2, [#allocation4], 128, 128, 8
    $region28: #{tpu_custom_call.1} parent=1 // pred_fallthru
      _
    // Predicated region
    $region29: #{tpu_custom_call.1} parent=1 // pred_check
      _
    $region30: #{tpu_custom_call.1} parent=1 // pred_check_branch
      %289 = sbr.rel (0) target = $region32
    $region31: #{tpu_custom_call.1} parent=1 // pred_region
      %290 = dma.done [#allocation4], 8192
    $region32: #{tpu_custom_call.1} parent=1 // pred_fallthru
      _
    %291 = vsyncpa [#allocation3], 1
    %292 = vsyncpa [#allocation6], 1
    %293 = vsyncpa [#allocation4], 1

</llo_original>
